<compile_context>
chip_gen: v5e
topology: v5e:2x2
jax: 0.10.0
libtpu: 0.0.40
codegen_flags: <defaults>
</compile_context>

<pallas_src>
import functools

import jax
import jax.numpy as jnp
from jax import lax
from jax.experimental import pallas as pl
from jax.experimental.pallas import tpu as pltpu

_EPS = 1e-8
_EPS_SQ = _EPS * _EPS  # clamp applied to ||x||^2


def _round_up(x, m):
    return ((x + m - 1) // m) * m


# ----------------------------------------------------------------------------
# Kernel 1: streaming sum of L2-normalized image rows.
#   grid = (cdiv(n_img, tile),), reduction axis ("arbitrary"); the output block
#   index is constant so out_ref stays resident and is used as the accumulator.
# ----------------------------------------------------------------------------
def _img_norm_sum_kernel(img_ref, out_ref, *, tile, n_img):
    i = pl.program_id(0)

    @pl.when(i == 0)
    def _init():
        out_ref[...] = jnp.zeros_like(out_ref)

    def _accumulate(ragged):
        img = img_ref[...].astype(jnp.float32)                    # (tile, D)
        if ragged:
            # Rows past n_img are undefined (NOT zeros) — mask them out.
            rem = n_img - i * tile
            valid = lax.broadcasted_iota(jnp.int32, (tile, 1), 0) < rem
            img = jnp.where(valid, img, 0.0)
        sumsq = jnp.sum(img * img, axis=-1, keepdims=True)        # (tile, 1)
        inv_norm = lax.rsqrt(jnp.maximum(sumsq, jnp.float32(_EPS_SQ)))
        if ragged:
            inv_norm = jnp.where(valid, inv_norm, 0.0)
        # Weighted row-sum on the MXU: (1, tile) x (tile, D) -> (1, D).
        out_ref[...] += lax.dot_general(
            inv_norm, img,
            dimension_numbers=(((0,), (0,)), ((), ())),
            preferred_element_type=jnp.float32)

    if n_img % tile == 0:
        _accumulate(False)
    else:
        last = pl.num_programs(0) - 1

        @pl.when(i < last)
        def _full():
            _accumulate(False)

        @pl.when(i == last)
        def _tail():
            _accumulate(True)


def _image_mean_vector(image_features):
    """(1, D) f32 mean of L2-normalized image rows via a tiled Pallas reduction."""
    n_img, d = image_features.shape
    itemsize = jnp.dtype(image_features.dtype).itemsize

    # ~8 MiB per input block (16 MiB double-buffered); rows multiple of 16.
    budget_bytes = 8 << 20
    rows = max(16, (budget_bytes // max(1, d * itemsize)) // 16 * 16)
    rows = min(rows, _round_up(n_img, 16))      # never bigger than the array
    num_blocks = pl.cdiv(n_img, rows)

    norm_sum = pl.pallas_call(
        functools.partial(_img_norm_sum_kernel, tile=rows, n_img=n_img),
        out_shape=jax.ShapeDtypeStruct((1, d), jnp.float32),
        grid=(num_blocks,),
        in_specs=[pl.BlockSpec((rows, d), lambda i: (i, 0))],
        out_specs=pl.BlockSpec((1, d), lambda i: (0, 0)),
        compiler_params=pltpu.CompilerParams(
            dimension_semantics=("arbitrary",),
            vmem_limit_bytes=32 * 1024 * 1024),
    )(image_features)

    return norm_sum * jnp.float32(1.0 / n_img)                    # (1, D) f32


# ----------------------------------------------------------------------------
# Kernel 2: per-text scores = (text . mean_image_vector) * 1/||text||.
#   Pure VPU/EUP elementwise + lane reduce; tiny, launch-overhead dominated.
# ----------------------------------------------------------------------------
def _scores_kernel(mean_ref, txt_ref, out_ref):
    txt = txt_ref[...].astype(jnp.float32)                        # (tile, D)
    mean_img = mean_ref[...]                                      # (1, D) f32
    sumsq = jnp.sum(txt * txt, axis=-1, keepdims=True)            # (tile, 1)
    inv_norm = lax.rsqrt(jnp.maximum(sumsq, jnp.float32(_EPS_SQ)))
    dots = jnp.sum(txt * mean_img, axis=-1, keepdims=True)        # (tile, 1)
    out_ref[...] = dots * inv_norm


def _text_scores(mean_img, text_embedding):
    """(n_txt,) f32 mean-cosine scores."""
    n_txt, d = text_embedding.shape
    itemsize = jnp.dtype(text_embedding.dtype).itemsize

    budget_bytes = 2 << 20
    tile = max(8, (budget_bytes // max(1, d * itemsize)) // 8 * 8)
    tile = min(tile, _round_up(n_txt, 8))
    n_pad = _round_up(n_txt, tile)

    txt = text_embedding
    if n_pad != n_txt:
        # Text tensor is small; this pad is cheap (unlike the image pad).
        txt = jnp.pad(txt, ((0, n_pad - n_txt), (0, 0)))

    scores = pl.pallas_call(
        _scores_kernel,
        out_shape=jax.ShapeDtypeStruct((n_pad, 1), jnp.float32),
        grid=(n_pad // tile,),
        in_specs=[pl.BlockSpec((1, d), lambda j: (0, 0)),
                  pl.BlockSpec((tile, d), lambda j: (j, 0))],
        out_specs=pl.BlockSpec((tile, 1), lambda j: (j, 0)),
        compiler_params=pltpu.CompilerParams(
            dimension_semantics=("parallel",)),
    )(mean_img, txt)
    return scores[:n_txt, 0]


def text_filter_cosine(image_features, text_embedding, text_queries_num,
                       attn_mask=None):
    """JAX/Pallas equivalent of TextFilterCosine.forward.

    image_features: (N_img, D)
    text_embedding: (N_txt, D)
    attn_mask:      optional (N_txt,) bool — True = keep token
    returns:        (text_queries_num, D), zero-padded if N_txt < text_queries_num
    """
    n_txt, d = text_embedding.shape

    mean_img = _image_mean_vector(image_features)                 # (1, D) f32
    scores = _text_scores(mean_img, text_embedding)               # (n_txt,) f32

    if attn_mask is not None:
        # The whole column was -inf before the image-axis mean in the
        # reference, so masking the mean is identical.
        scores = jnp.where(attn_mask, scores, -jnp.inf)

    # --- glue: top-k selection + gather + zero pad (plain JAX) --------------
    # TODO(synk): no clean Pallas TPU sort/top-k primitive; done with lax.top_k.
    k = min(text_queries_num, n_txt)
    _, selected_indices = lax.top_k(scores, k)
    new_text_embedding = jnp.zeros((text_queries_num, d),
                                   dtype=text_embedding.dtype)
    new_text_embedding = new_text_embedding.at[:k].set(
        text_embedding[selected_indices])
    return new_text_embedding


# ----------------------------------------------------------------------------
# Pure-JAX reference (mirrors the PyTorch forward) for a correctness check.
# ----------------------------------------------------------------------------
def _reference(image_features, text_embedding, text_queries_num, attn_mask=None):
    eps = 1e-8
    img = image_features.astype(jnp.float32)
    txt = text_embedding.astype(jnp.float32)
    img_n = img / jnp.maximum(
        jnp.sqrt(jnp.sum(img * img, axis=-1, keepdims=True)), eps)
    txt_n = txt / jnp.maximum(
        jnp.sqrt(jnp.sum(txt * txt, axis=-1, keepdims=True)), eps)
    sim = img_n @ txt_n.T                                         # (N_img, N_txt)
    if attn_mask is not None:
        sim = jnp.where(attn_mask[None, :], sim, -jnp.inf)
    scores = sim.mean(axis=0)
    k = min(text_queries_num, text_embedding.shape[0])
    sel = jnp.argsort(-scores)[:k]
    out = jnp.zeros((text_queries_num, text_embedding.shape[1]),
                    text_embedding.dtype)
    return out.at[:k].set(text_embedding[sel])


if __name__ == "__main__":
    key = jax.random.PRNGKey(0)
    k1, k2, k3, k4 = jax.random.split(key, 4)

    # ---- Case 1: small, aligned shapes (no ragged tail) ---------------------
    n_img, n_txt, embed_dim = 16, 8, 32
    text_queries_num = 4
    pad_token_id = 0  # unused in forward (kept for parity with __init__)

    image_features = jax.random.normal(k1, (n_img, embed_dim), dtype=jnp.float32)
    text_embedding = jax.random.normal(k2, (n_txt, embed_dim), dtype=jnp.float32)
    attn_mask = jnp.array([1, 1, 1, 1, 1, 1, 0, 0], dtype=jnp.bool_)  # True=keep

    out = text_filter_cosine(image_features, text_embedding,
                             text_queries_num, attn_mask)
    jax.block_until_ready(out)
    assert out.shape == (text_queries_num, embed_dim)
    ref = _reference(image_features, text_embedding, text_queries_num, attn_mask)
    assert jnp.allclose(out, ref, atol=1e-4, rtol=1e-4)

    # No mask + text_queries_num > n_txt exercises the zero-pad path.
    out_pad = text_filter_cosine(image_features, text_embedding, 12, None)
    jax.block_until_ready(out_pad)
    ref_pad = _reference(image_features, text_embedding, 12, None)
    assert out_pad.shape == (12, embed_dim)
    assert jnp.allclose(out_pad, ref_pad, atol=1e-4, rtol=1e-4)

    # ---- Case 2: ragged n_img / n_txt (exercises in-kernel tail masking) ----
    n_img2, n_txt2 = 100, 13
    image_features2 = jax.random.normal(k3, (n_img2, embed_dim), dtype=jnp.float32)
    text_embedding2 = jax.random.normal(k4, (n_txt2, embed_dim), dtype=jnp.float32)
    attn_mask2 = jnp.arange(n_txt2) < 10          # keep first 10 texts

    out2 = text_filter_cosine(image_features2, text_embedding2, 6, attn_mask2)
    jax.block_until_ready(out2)
    ref2 = _reference(image_features2, text_embedding2, 6, attn_mask2)
    assert out2.shape == (6, embed_dim)
    assert jnp.allclose(out2, ref2, atol=1e-4, rtol=1e-4)

    print("KERNEL_OK")
</pallas_src>

<mosaic_0001>
module attributes {stable_mosaic.version = 11 : i64} {
  func.func @_img_norm_sum_kernel(%arg0: i32, %arg1: memref<16x32xf32, #tpu.memory_space<vmem>>, %arg2: memref<1x32xf32, #tpu.memory_space<vmem>>) attributes {dimension_semantics = [#tpu.dimension_semantics<arbitrary>], iteration_bounds = array<i64: 1>, scalar_prefetch = 0 : i64, scratch_operands = 0 : i64, tpu.core_type = #tpu.core_type<tc>, window_params = [{transform_indices = @transform_0, window_bounds = array<i64: 16, 32>}, {pipeline_mode = #tpu.pipeline_mode<synchronous>, transform_indices = @transform_1, window_bounds = array<i64: 1, 32>}]} {
    %c0_i32 = arith.constant 0 : i32
    %0 = arith.cmpi eq, %arg0, %c0_i32 : i32
    %1 = arith.extui %0 : i1 to i32
    %c0_i32_0 = arith.constant 0 : i32
    %2 = arith.cmpi ne, %1, %c0_i32_0 : i32
    scf.if %2 {
      %cst_8 = arith.constant 0.000000e+00 : f32
      %14 = vector.broadcast %cst_8 : f32 to vector<1x32xf32>
      %c0_9 = arith.constant 0 : index
      %c0_10 = arith.constant 0 : index
      %15 = vector.load %arg2[%c0_9, %c0_10] : memref<1x32xf32, #tpu.memory_space<vmem>>, vector<1x32xf32>
      tpu.vector_store %arg2[%c0_9, %c0_10], %14 {strides = array<i32>} : memref<1x32xf32, #tpu.memory_space<vmem>>, vector<1x32xf32>,
    } else {
    }
    %c0 = arith.constant 0 : index
    %c0_1 = arith.constant 0 : index
    %3 = vector.load %arg1[%c0, %c0_1] : memref<16x32xf32, #tpu.memory_space<vmem>>, vector<16x32xf32>
    %4 = arith.mulf %3, %3 : vector<16x32xf32>
    %cst = arith.constant dense<0.000000e+00> : vector<16xf32>
    %5 = vector.multi_reduction <add>, %4, %cst [1] : vector<16x32xf32> to vector<16xf32>
    %6 = vector.shape_cast %5 : vector<16xf32> to vector<16x1xf32>
    %cst_2 = arith.constant 1.000000e-16 : f32
    %7 = vector.broadcast %cst_2 : f32 to vector<16x1xf32>
    %8 = arith.maximumf %6, %7 : vector<16x1xf32>
    %9 = math.rsqrt %8 : vector<16x1xf32>
    %c0_3 = arith.constant 0 : index
    %c0_4 = arith.constant 0 : index
    %10 = vector.load %arg2[%c0_3, %c0_4] : memref<1x32xf32, #tpu.memory_space<vmem>>, vector<1x32xf32>
    %cst_5 = arith.constant dense<0.000000e+00> : vector<1x32xf32>
    %11 = tpu.matmul %9, %3, %cst_5 {dimension_numbers = #tpu.dot_dimension_numbers<[0], [0], [1], [1], [0, 1, 1, 1], [], []>} : vector<16x1xf32>, vector<16x32xf32>, vector<1x32xf32> -> vector<1x32xf32>
    %12 = arith.addf %10, %11 : vector<1x32xf32>
    %c0_6 = arith.constant 0 : index
    %c0_7 = arith.constant 0 : index
    %13 = vector.load %arg2[%c0_6, %c0_7] : memref<1x32xf32, #tpu.memory_space<vmem>>, vector<1x32xf32>
    tpu.vector_store %arg2[%c0_6, %c0_7], %12 {strides = array<i32>} : memref<1x32xf32, #tpu.memory_space<vmem>>, vector<1x32xf32>,
    return
  }
  func.func @transform_0(%arg0: i32) -> (i32, i32) {
    %c0_i32 = arith.constant 0 : i32
    %c0_i32_0 = arith.constant 0 : i32
    return %arg0, %c0_i32 : i32, i32
  }
  func.func @transform_1(%arg0: i32) -> (i32, i32) {
    %c0_i32 = arith.constant 0 : i32
    %c0_i32_0 = arith.constant 0 : i32
    %c0_i32_1 = arith.constant 0 : i32
    return %c0_i32, %c0_i32_0 : i32, i32
  }
}

</mosaic_0001>

<llo_original>
// kernel: tpu_custom_call.1
$region0: #{tpu_custom_call.1}
  #allocation0 [shape = 'u32[]', space=smem, size = 0x4, offset = 0x4, fixed_abs, tag = 'smem constant byte address 0x4 - core index']
  #allocation1 [shape = 'u32[72,128]{1,0:T(1,128)}', space=vmem, size = 0x9000, scoped, tag = 'internal scratch']
  %s0 = inlined_call_operand.hbm [shape: f32[16,32], index: 0, kind: input, shape index: {}]
  %s1 = inlined_call_operand.hbm [shape: f32[1,32], index: 1, kind: output, shape index: {}]
  %s2 = sld [smem:[#allocation0]]
  $region22: #{tpu_custom_call.1} parent=0
    _
  %s4 = ssub.s32 1, %s2
  %s5 = scalar_select 0, %s4, %s2
  $region1: #{tpu_custom_call.1} parent=0
    #allocation2 [shape = 'u8[8192]{0}', space=vmem, size = 0x2000, scoped, tag = 'input window, operand 0, single buffered']
    #allocation3 [shape = 's32[1]{0}', space=sflag, size = 0x4, scoped, tag = 'scoped memory for tpu_custom_call.1']
    #allocation4 [shape = 's32[1]{0}', space=sflag, size = 0x4, scoped, tag = 'scoped memory for tpu_custom_call.1']
    #allocation5 [shape = 'u8[512]{0}', space=vmem, size = 0x400, scoped, tag = 'output window, operand 0, single buffered']
    %6 = vsyncpa [#allocation3], 0
    %7 = vsyncpa [#allocation4], 0
    // Predicated region
    $region2: #{tpu_custom_call.1} parent=1 // pred_check
      _
    $region3: #{tpu_custom_call.1} parent=1 // pred_check_branch
      %9 = sbr.rel (0) target = $region5
    $region4: #{tpu_custom_call.1} parent=1 // pred_region
      %11 = vsyncadd [#allocation3], 0
      %s12 = sshll.u32 %s0, 4
      %s13 = int_to_ptr.hbm [resolvable:$true] %s12
      %s14 = sshll.u32 [#allocation2], 4
      %s15 = int_to_ptr.vmem [resolvable:$true] %s14
      %20 = dma.hbm_to_vmem [thread:$0]  %s13, 256, %s15, [#allocation3], 128, 128, 8
    $region5: #{tpu_custom_call.1} parent=1 // pred_fallthru
      _
    // Predicated region
    $region6: #{tpu_custom_call.1} parent=1 // pred_check
      _
    $region7: #{tpu_custom_call.1} parent=1 // pred_check_branch
      %22 = sbr.rel (0) target = $region9
    $region8: #{tpu_custom_call.1} parent=1 // pred_region
      %24 = dma.done [#allocation3], 256
    $region9: #{tpu_custom_call.1} parent=1 // pred_fallthru
      _
    %p25 = scmp.eq.s32.totalorder 0, 0
    // Predicated region
    $region10: #{tpu_custom_call.1} parent=1 // pred_check
      %p26 = pneg %p25
    $region11: #{tpu_custom_call.1} parent=1 // pred_check_branch
      %28 = sbr.rel (%p26) target = $region13
    $region12: #{tpu_custom_call.1} parent=1 // pred_region
      %vm29 = vcmask 253952
      %30 = vst.msk [vmem:[#allocation5] sm:$0x1] %vm29, 0.0
    $region13: #{tpu_custom_call.1} parent=1 // pred_fallthru
      _
    %v31 = vld [vmem:[#allocation2] sm:$0xff]
    %v32 = vld [vmem:[#allocation2 + $0x8] sm:$0xff]
    %v33 = vmul.f32 %v31, %v31
    %v34 = vmul.f32 %v32, %v32
    %vm35 = vcmask 261120
    %v36 = vsel %vm35, %v33, 0.0
    %37 = vadd.xlane.f32.xlu0 %v36
    %v38 = vpop.xlane.xlu0 %37
    %v39 = vsel %vm35, %v34, 0.0
    %40 = vadd.xlane.f32.xlu0 %v39
    %v41 = vpop.xlane.xlu0 %40
    %v42 = vmax.f32 %v38, 1e-16
    %v43 = vmax.f32 %v41, 1e-16
    %v44 = vrsqrt.pop %v42
    %v45 = vmul.f32 %v44, %v42
    %v46 = vmul.f32 %v45, %v44
    %v47 = vmul.f32 0.5, %v46
    %v48 = vsub.f32 1.5, %v47
    %v49 = vmul.f32 %v44, %v48
    %vm50 = vweird.f32 %v42
    %vm51 = vweird.f32 %v44
    %vm52 = vmor %vm50, %vm51
    %v53 = vsel %vm52, %v44, %v49
    %v54 = vrsqrt.pop %v43
    %v55 = vmul.f32 %v54, %v43
    %v56 = vmul.f32 %v55, %v54
    %v57 = vmul.f32 0.5, %v56
    %v58 = vsub.f32 1.5, %v57
    %v59 = vmul.f32 %v54, %v58
    %vm60 = vweird.f32 %v43
    %vm61 = vweird.f32 %v54
    %vm62 = vmor %vm60, %vm61
    %v63 = vsel %vm62, %v54, %v59
    %v64 = vld [vmem:[#allocation5] sm:$0x1]
    %65 = vxpose.xlu0.b32.start [1/16] %v53, 128
    %66 = vxpose.xlu0.b32.cont [2/16] %v63, 128
    %67 = vxpose.xlu0.b32.cont [3/16] 0.0, 128
    %68 = vxpose.xlu0.b32.cont [4/16] 0.0, 128
    %69 = vxpose.xlu0.b32.cont [5/16] 0.0, 128
    %70 = vxpose.xlu0.b32.cont [6/16] 0.0, 128
    %71 = vxpose.xlu0.b32.cont [7/16] 0.0, 128
    %72 = vxpose.xlu0.b32.cont [8/16] 0.0, 128
    %73 = vxpose.xlu0.b32.cont [9/16] 0.0, 128
    %74 = vxpose.xlu0.b32.cont [10/16] 0.0, 128
    %75 = vxpose.xlu0.b32.cont [11/16] 0.0, 128
    %76 = vxpose.xlu0.b32.cont [12/16] 0.0, 128
    %77 = vxpose.xlu0.b32.cont [13/16] 0.0, 128
    %78 = vxpose.xlu0.b32.cont [14/16] 0.0, 128
    %79 = vxpose.xlu0.b32.cont [15/16] 0.0, 128
    %80 = vxpose.xlu0.b32.end [16/16] 0.0, 128
    %v81 = vpop.trf.xlu0
    %v82 = vpop.trf.xlu0
    %v83 = vpop.trf.xlu0
    %v84 = vpop.trf.xlu0
    %v85 = vpop.trf.xlu0
    %v86 = vpop.trf.xlu0
    %v87 = vpop.trf.xlu0
    %v88 = vpop.trf.xlu0
    %v89 = vpop.trf.xlu0
    %v90 = vpop.trf.xlu0
    %v91 = vpop.trf.xlu0
    %v92 = vpop.trf.xlu0
    %v93 = vpop.trf.xlu0
    %v94 = vpop.trf.xlu0
    %v95 = vpop.trf.xlu0
    %v96 = vpop.trf.xlu0
    %vm97 = vcmask 130048
    %v99 = vsel %vm97, %v81, 0
    %101 = vmatpush.msra.mxu0 0.0
    %102 = vmatpush.msra.mxu0 0.0
    %103 = vmatpush.msra.mxu0 0.0
    %104 = vmatpush.msra.mxu0 0.0
    %105 = vmatpush.msra.mxu0 0.0
    %106 = vmatpush.msra.mxu0 0.0
    %107 = vmatpush.msra.mxu0 0.0
    %108 = vmatpush.msra.mxu0 0.0
    %109 = vmatpush.msra.mxu0 0.0
    %110 = vmatpush.msra.mxu0 0.0
    %111 = vmatpush.msra.mxu0 0.0
    %112 = vmatpush.msra.mxu0 0.0
    %113 = vmatpush.msra.mxu0 0.0
    %114 = vmatpush.msra.mxu0 0.0
    %115 = vmatpush.msra.mxu0 %v32
    %116 = vmatpush.msra.mxu0 %v31
    %117 = vmatmul.f32.gmra.mxu0 %v99
    %v118 = vpop.f32.mrf.mxu0
    %v119 = vadd.f32 0.0, %v118
    %120 = vdwg.mxu0
    %v121 = vadd.f32 %v64, %v119
    %vm122 = vcmask 253952
    %123 = vst.msk [vmem:[#allocation5] sm:$0x1] %vm122, %v121
    // Predicated region
    $region14: #{tpu_custom_call.1} parent=1 // pred_check
      _
    $region15: #{tpu_custom_call.1} parent=1 // pred_check_branch
      %125 = sbr.rel (0) target = $region17
    $region16: #{tpu_custom_call.1} parent=1 // pred_region
      %127 = vsyncadd [#allocation4], 0
      %s129 = sshll.u32 [#allocation5], 4
      %s130 = int_to_ptr.vmem [resolvable:$true] %s129
      %s131 = sshll.u32 %s1, 4
      %s132 = int_to_ptr.hbm [resolvable:$true] %s131
      %134 = dma.vmem_to_hbm [thread:$0]  %s130, 16, %s132, [#allocation4]
    $region17: #{tpu_custom_call.1} parent=1 // pred_fallthru
      _
    // Predicated region
    $region18: #{tpu_custom_call.1} parent=1 // pred_check
      _
    $region19: #{tpu_custom_call.1} parent=1 // pred_check_branch
      %136 = sbr.rel (0) target = $region21
    $region20: #{tpu_custom_call.1} parent=1 // pred_region
      %138 = dma.done [#allocation4], 16
    $region21: #{tpu_custom_call.1} parent=1 // pred_fallthru
      _
    %139 = vsyncpa [#allocation3], 1
    %140 = vsyncpa [#allocation4], 1

</llo_original>
